<compile_context>
chip_gen: v6e
topology: v6e:2x2x1
jax: 0.10.0
libtpu: 0.0.40
codegen_flags: <defaults>
</compile_context>

<pallas_src>
import functools

import jax
import jax.numpy as jnp
from jax.experimental import pallas as pl
from jax.experimental.pallas import tpu as pltpu


def _round_up(x, m):
    return ((x + m - 1) // m) * m


def _dense_block_kernel(n_layers, *refs):
    """Fused forward over all layers: h_{i+1} = relu(h_i @ W_i + b_i).

    refs layout:
      x_ref,
      w_hbm_0..w_hbm_{L-1}   (raw HBM refs, memory_space=pl.ANY),
      b_0..b_{L-1}           (VMEM, (1, N) f32),
      o_0..o_{L-1}           (VMEM outputs),
      w_vmem_0..w_vmem_{L-1} (VMEM scratch, one per layer),
      sem                    (DMA semaphores, shape (L,)).

    Layer count / shapes are static, so the Python loop unrolls at trace time and the
    running activation `h` never leaves on-chip memory; only the per-layer outputs the
    module must return are written back.
    """
    x_ref = refs[0]
    w_hbm = refs[1:1 + n_layers]
    b_refs = refs[1 + n_layers:1 + 2 * n_layers]
    o_refs = refs[1 + 2 * n_layers:1 + 3 * n_layers]
    w_vmem = refs[1 + 3 * n_layers:1 + 4 * n_layers]
    sem = refs[1 + 4 * n_layers]

    # Kick off all weight DMAs immediately; only layer 0's copy is on the critical path,
    # the rest overlap with earlier layers' matmuls.
    copies = []
    for i in range(n_layers):
        cp = pltpu.make_async_copy(w_hbm[i], w_vmem[i], sem.at[i])
        cp.start()
        copies.append(cp)

    mxu_dtype = w_vmem[0].dtype           # f32 by default, bf16 if weight_dtype=bf16
    h = x_ref[...].astype(jnp.float32)
    for i in range(n_layers):
        copies[i].wait()
        acc = jnp.dot(h.astype(mxu_dtype), w_vmem[i][...],
                      preferred_element_type=jnp.float32)
        acc = acc + b_refs[i][...]        # (1, N) bias broadcasts over rows, f32 epilogue
        h = jnp.maximum(acc, 0.0)
        o_refs[i][...] = h.astype(o_refs[i].dtype)


def _vmem_bytes_estimate(M, input_dims, w_shapes, weight_itemsize):
    """Rough working-set estimate (tile-padded) for the gridless all-in-VMEM design."""
    Mr = _round_up(max(M, 1), 8)
    x_b = Mr * _round_up(input_dims, 128) * 4
    w_b = sum(_round_up(k, 8) * _round_up(n, 128) * weight_itemsize for k, n in w_shapes)
    b_b = sum(8 * _round_up(n, 128) * 4 for _, n in w_shapes)
    o_b = sum(Mr * _round_up(n, 128) * 4 for _, n in w_shapes)
    act_b = 2 * Mr * max(_round_up(n, 128) for _, n in w_shapes) * 4
    return x_b + w_b + b_b + o_b + act_b


def dense_block_forward(x, weights, biases, out_dtype, vmem_limit_bytes):
    """Single pallas_call for the whole block (no grid: everything fits in VMEM)."""
    n_layers = len(weights)
    M = x.shape[0]
    out_shape = tuple(jax.ShapeDtypeStruct((M, w.shape[1]), out_dtype) for w in weights)
    vmem = pl.BlockSpec(memory_space=pltpu.MemorySpace.VMEM)
    hbm = pl.BlockSpec(memory_space=pl.ANY)
    scratch = [pltpu.VMEM(w.shape, w.dtype) for w in weights]
    scratch.append(pltpu.SemaphoreType.DMA((n_layers,)))
    return pl.pallas_call(
        functools.partial(_dense_block_kernel, n_layers),
        out_shape=out_shape,
        in_specs=[vmem] + [hbm] * n_layers + [vmem] * n_layers,
        out_specs=tuple([vmem] * n_layers),
        scratch_shapes=scratch,
        compiler_params=pltpu.CompilerParams(vmem_limit_bytes=vmem_limit_bytes),
    )(x, *weights, *biases)


class DenseBlockPallas:
    """JAX/Pallas equivalent of DENSE_BLOCK (bnorm=False, dropout=0.0, activation='relu')."""

    def __init__(self, input_dims, dense_dims, key, weight_dtype=jnp.float32):
        self.input_dims = input_dims
        self.dense_dims = list(dense_dims)
        self.weight_dtype = weight_dtype

        dims = [input_dims] + self.dense_dims
        # Layer-0 K stays at the true input_dims (so x needs no padding); every feature
        # output axis (and hence every later K axis) is lane-padded to 128.
        pdims = [input_dims] + [_round_up(d, 128) for d in self.dense_dims]

        self.params = []    # unpadded f32 (w_t, b), for the reference check
        self.weights = []   # padded, pre-transposed (K, N_pad), weight_dtype
        self.biases = []    # padded (1, N_pad), f32
        for l in range(len(self.dense_dims)):
            key, wk, bk = jax.random.split(key, 3)
            fan_in = dims[l]
            bound = 1.0 / (fan_in ** 0.5)   # mimic nn.Linear default uniform init range
            w_t = jax.random.uniform(wk, (dims[l], dims[l + 1]),
                                     minval=-bound, maxval=bound, dtype=jnp.float32)
            b = jax.random.uniform(bk, (dims[l + 1],),
                                   minval=-bound, maxval=bound, dtype=jnp.float32)
            self.params.append((w_t, b))
            # Zero-pad: padded weight rows/cols and bias cols are 0, so padded activation
            # lanes stay exactly 0 through every layer (relu(0) == 0) and contribute
            # nothing to the next layer's dot.
            w_pad = jnp.zeros((pdims[l], pdims[l + 1]), dtype=weight_dtype)
            w_pad = w_pad.at[:dims[l], :dims[l + 1]].set(w_t.astype(weight_dtype))
            b_pad = jnp.zeros((1, pdims[l + 1]), dtype=jnp.float32)
            b_pad = b_pad.at[0, :dims[l + 1]].set(b)
            self.weights.append(w_pad)
            self.biases.append(b_pad)

        self._w_shapes = [tuple(w.shape) for w in self.weights]
        self._forward = jax.jit(self._forward_impl)

    def _forward_impl(self, x):
        M = x.shape[0]
        est = _vmem_bytes_estimate(M, self.input_dims, self._w_shapes,
                                   jnp.dtype(self.weight_dtype).itemsize)
        if est > (48 << 20):
            # TODO(synk): tiled (K/N grid) fallback once weights exceed the VMEM budget.
            raise NotImplementedError(
                f"dense_dims too large for all-in-VMEM kernel (~{est >> 20} MiB needed)")
        vmem_limit = min(64 << 20, max(16 << 20, int(1.5 * est) + (2 << 20)))
        outs = dense_block_forward(x, self.weights, self.biases, x.dtype, vmem_limit)
        # Slice only the feature axes that were actually lane-padded; batch is untouched.
        return tuple(o if o.shape[1] == d else o[:, :d]
                     for o, d in zip(outs, self.dense_dims))

    def __call__(self, x):
        return self._forward(x)


def _reference(x, params):
    outs = ()
    for (w_t, b) in params:
        x = jnp.maximum(x @ w_t + b, 0.0)
        outs += (x,)
    return outs


if __name__ == "__main__":
    key = jax.random.PRNGKey(0)
    key, xk, pk = jax.random.split(key, 3)

    # Small shapes consistent with the module: batch=8, input_dims=128.
    # Middle dim 200 is deliberately NOT a multiple of 128 to exercise the
    # feature-padding / output-slicing path.
    batch = 8
    input_dims = 128
    dense_dims = [256, 200, 256]

    x = jax.random.normal(xk, (batch, input_dims), dtype=jnp.float32)
    ref = None

    # --- default f32 path: strict check --------------------------------------------
    block = DenseBlockPallas(input_dims, dense_dims, pk)
    h_list = block(x)
    h_list = jax.tree_util.tree_map(jax.block_until_ready, h_list)

    ref = _reference(x, block.params)
    for got, want in zip(h_list, ref):
        assert got.shape == want.shape, (got.shape, want.shape)
        assert jnp.max(jnp.abs(got - want)) < 1e-4

    # --- opt-in bf16 MXU-input path: relaxed (relative) tolerance --------------------
    block_bf16 = DenseBlockPallas(input_dims, dense_dims, pk, weight_dtype=jnp.bfloat16)
    h_bf16 = block_bf16(x)
    h_bf16 = jax.tree_util.tree_map(jax.block_until_ready, h_bf16)
    for got, want in zip(h_bf16, ref):
        assert got.shape == want.shape, (got.shape, want.shape)
        rel = jnp.max(jnp.abs(got - want)) / (jnp.max(jnp.abs(want)) + 1e-6)
        assert rel < 5e-2, rel

    print("KERNEL_OK")
</pallas_src>

<mosaic_0001>
module attributes {stable_mosaic.version = 11 : i64} {
  func.func @_dense_block_kernel(%arg0: memref<8x128xf32, #tpu.memory_space<vmem>>, %arg1: memref<128x256xf32, #tpu.memory_space<any>>, %arg2: memref<256x256xf32, #tpu.memory_space<any>>, %arg3: memref<256x256xf32, #tpu.memory_space<any>>, %arg4: memref<1x256xf32, #tpu.memory_space<vmem>>, %arg5: memref<1x256xf32, #tpu.memory_space<vmem>>, %arg6: memref<1x256xf32, #tpu.memory_space<vmem>>, %arg7: memref<8x256xf32, #tpu.memory_space<vmem>>, %arg8: memref<8x256xf32, #tpu.memory_space<vmem>>, %arg9: memref<8x256xf32, #tpu.memory_space<vmem>>, %arg10: memref<128x256xf32, #tpu.memory_space<vmem>>, %arg11: memref<256x256xf32, #tpu.memory_space<vmem>>, %arg12: memref<256x256xf32, #tpu.memory_space<vmem>>, %arg13: memref<3x!tpu.dma_semaphore, #tpu.memory_space<semaphore_mem>>) attributes {dimension_semantics = [], scalar_prefetch = 0 : i64, scratch_operands = 4 : i64, tpu.core_type = #tpu.core_type<tc>} {
    %c0_i32 = arith.constant 0 : i32
    %0 = tpu.memref_slice %arg13[%c0_i32] : memref<3x!tpu.dma_semaphore, #tpu.memory_space<semaphore_mem>> -> memref<1x!tpu.dma_semaphore, #tpu.memory_space<semaphore_mem>>
    %1 = tpu.memref_squeeze %0 : memref<1x!tpu.dma_semaphore, #tpu.memory_space<semaphore_mem>> -> memref<!tpu.dma_semaphore, #tpu.memory_space<semaphore_mem>>
    tpu.enqueue_dma source(%arg1 : memref<128x256xf32, #tpu.memory_space<any>>) target(%arg10 : memref<128x256xf32, #tpu.memory_space<vmem>>) target_semaphore(%1 : memref<!tpu.dma_semaphore, #tpu.memory_space<semaphore_mem>>)
    %c1_i32 = arith.constant 1 : i32
    %2 = tpu.memref_slice %arg13[%c1_i32] : memref<3x!tpu.dma_semaphore, #tpu.memory_space<semaphore_mem>> -> memref<1x!tpu.dma_semaphore, #tpu.memory_space<semaphore_mem>>
    %3 = tpu.memref_squeeze %2 : memref<1x!tpu.dma_semaphore, #tpu.memory_space<semaphore_mem>> -> memref<!tpu.dma_semaphore, #tpu.memory_space<semaphore_mem>>
    tpu.enqueue_dma source(%arg2 : memref<256x256xf32, #tpu.memory_space<any>>) target(%arg11 : memref<256x256xf32, #tpu.memory_space<vmem>>) target_semaphore(%3 : memref<!tpu.dma_semaphore, #tpu.memory_space<semaphore_mem>>)
    %c2_i32 = arith.constant 2 : i32
    %4 = tpu.memref_slice %arg13[%c2_i32] : memref<3x!tpu.dma_semaphore, #tpu.memory_space<semaphore_mem>> -> memref<1x!tpu.dma_semaphore, #tpu.memory_space<semaphore_mem>>
    %5 = tpu.memref_squeeze %4 : memref<1x!tpu.dma_semaphore, #tpu.memory_space<semaphore_mem>> -> memref<!tpu.dma_semaphore, #tpu.memory_space<semaphore_mem>>
    tpu.enqueue_dma source(%arg3 : memref<256x256xf32, #tpu.memory_space<any>>) target(%arg12 : memref<256x256xf32, #tpu.memory_space<vmem>>) target_semaphore(%5 : memref<!tpu.dma_semaphore, #tpu.memory_space<semaphore_mem>>)
    %c0 = arith.constant 0 : index
    %c0_0 = arith.constant 0 : index
    %6 = vector.load %arg0[%c0, %c0_0] : memref<8x128xf32, #tpu.memory_space<vmem>>, vector<8x128xf32>
    %c0_i32_1 = arith.constant 0 : i32
    %7 = tpu.memref_slice %arg13[%c0_i32_1] : memref<3x!tpu.dma_semaphore, #tpu.memory_space<semaphore_mem>> -> memref<1x!tpu.dma_semaphore, #tpu.memory_space<semaphore_mem>>
    %8 = tpu.memref_squeeze %7 : memref<1x!tpu.dma_semaphore, #tpu.memory_space<semaphore_mem>> -> memref<!tpu.dma_semaphore, #tpu.memory_space<semaphore_mem>>
    tpu.wait_dma2 semaphore(%8 : memref<!tpu.dma_semaphore, #tpu.memory_space<semaphore_mem>>) src(%arg1 : memref<128x256xf32, #tpu.memory_space<any>>) dst(%arg10 : memref<128x256xf32, #tpu.memory_space<vmem>>)
    %c0_2 = arith.constant 0 : index
    %c0_3 = arith.constant 0 : index
    %9 = vector.load %arg10[%c0_2, %c0_3] : memref<128x256xf32, #tpu.memory_space<vmem>>, vector<128x256xf32>
    %cst = arith.constant dense<0.000000e+00> : vector<8x256xf32>
    %10 = tpu.matmul %6, %9, %cst {dimension_numbers = #tpu.dot_dimension_numbers<[1], [0], [0], [1], [0, 0, 1, 1], [], []>} : vector<8x128xf32>, vector<128x256xf32>, vector<8x256xf32> -> vector<8x256xf32>
    %c0_4 = arith.constant 0 : index
    %c0_5 = arith.constant 0 : index
    %11 = vector.load %arg4[%c0_4, %c0_5] : memref<1x256xf32, #tpu.memory_space<vmem>>, vector<1x256xf32>
    %12 = vector.broadcast %11 : vector<1x256xf32> to vector<8x256xf32>
    %13 = arith.addf %10, %12 : vector<8x256xf32>
    %cst_6 = arith.constant 0.000000e+00 : f32
    %14 = vector.broadcast %cst_6 : f32 to vector<8x256xf32>
    %15 = arith.maximumf %13, %14 : vector<8x256xf32>
    %c0_7 = arith.constant 0 : index
    %c0_8 = arith.constant 0 : index
    %16 = vector.load %arg7[%c0_7, %c0_8] : memref<8x256xf32, #tpu.memory_space<vmem>>, vector<8x256xf32>
    tpu.vector_store %arg7[%c0_7, %c0_8], %15 {strides = array<i32>} : memref<8x256xf32, #tpu.memory_space<vmem>>, vector<8x256xf32>,
    %c1_i32_9 = arith.constant 1 : i32
    %17 = tpu.memref_slice %arg13[%c1_i32_9] : memref<3x!tpu.dma_semaphore, #tpu.memory_space<semaphore_mem>> -> memref<1x!tpu.dma_semaphore, #tpu.memory_space<semaphore_mem>>
    %18 = tpu.memref_squeeze %17 : memref<1x!tpu.dma_semaphore, #tpu.memory_space<semaphore_mem>> -> memref<!tpu.dma_semaphore, #tpu.memory_space<semaphore_mem>>
    tpu.wait_dma2 semaphore(%18 : memref<!tpu.dma_semaphore, #tpu.memory_space<semaphore_mem>>) src(%arg2 : memref<256x256xf32, #tpu.memory_space<any>>) dst(%arg11 : memref<256x256xf32, #tpu.memory_space<vmem>>)
    %c0_10 = arith.constant 0 : index
    %c0_11 = arith.constant 0 : index
    %19 = vector.load %arg11[%c0_10, %c0_11] : memref<256x256xf32, #tpu.memory_space<vmem>>, vector<256x256xf32>
    %cst_12 = arith.constant dense<0.000000e+00> : vector<8x256xf32>
    %20 = tpu.matmul %15, %19, %cst_12 {dimension_numbers = #tpu.dot_dimension_numbers<[1], [0], [0], [1], [0, 0, 1, 1], [], []>} : vector<8x256xf32>, vector<256x256xf32>, vector<8x256xf32> -> vector<8x256xf32>
    %c0_13 = arith.constant 0 : index
    %c0_14 = arith.constant 0 : index
    %21 = vector.load %arg5[%c0_13, %c0_14] : memref<1x256xf32, #tpu.memory_space<vmem>>, vector<1x256xf32>
    %22 = vector.broadcast %21 : vector<1x256xf32> to vector<8x256xf32>
    %23 = arith.addf %20, %22 : vector<8x256xf32>
    %cst_15 = arith.constant 0.000000e+00 : f32
    %24 = vector.broadcast %cst_15 : f32 to vector<8x256xf32>
    %25 = arith.maximumf %23, %24 : vector<8x256xf32>
    %c0_16 = arith.constant 0 : index
    %c0_17 = arith.constant 0 : index
    %26 = vector.load %arg8[%c0_16, %c0_17] : memref<8x256xf32, #tpu.memory_space<vmem>>, vector<8x256xf32>
    tpu.vector_store %arg8[%c0_16, %c0_17], %25 {strides = array<i32>} : memref<8x256xf32, #tpu.memory_space<vmem>>, vector<8x256xf32>,
    %c2_i32_18 = arith.constant 2 : i32
    %27 = tpu.memref_slice %arg13[%c2_i32_18] : memref<3x!tpu.dma_semaphore, #tpu.memory_space<semaphore_mem>> -> memref<1x!tpu.dma_semaphore, #tpu.memory_space<semaphore_mem>>
    %28 = tpu.memref_squeeze %27 : memref<1x!tpu.dma_semaphore, #tpu.memory_space<semaphore_mem>> -> memref<!tpu.dma_semaphore, #tpu.memory_space<semaphore_mem>>
    tpu.wait_dma2 semaphore(%28 : memref<!tpu.dma_semaphore, #tpu.memory_space<semaphore_mem>>) src(%arg3 : memref<256x256xf32, #tpu.memory_space<any>>) dst(%arg12 : memref<256x256xf32, #tpu.memory_space<vmem>>)
    %c0_19 = arith.constant 0 : index
    %c0_20 = arith.constant 0 : index
    %29 = vector.load %arg12[%c0_19, %c0_20] : memref<256x256xf32, #tpu.memory_space<vmem>>, vector<256x256xf32>
    %cst_21 = arith.constant dense<0.000000e+00> : vector<8x256xf32>
    %30 = tpu.matmul %25, %29, %cst_21 {dimension_numbers = #tpu.dot_dimension_numbers<[1], [0], [0], [1], [0, 0, 1, 1], [], []>} : vector<8x256xf32>, vector<256x256xf32>, vector<8x256xf32> -> vector<8x256xf32>
    %c0_22 = arith.constant 0 : index
    %c0_23 = arith.constant 0 : index
    %31 = vector.load %arg6[%c0_22, %c0_23] : memref<1x256xf32, #tpu.memory_space<vmem>>, vector<1x256xf32>
    %32 = vector.broadcast %31 : vector<1x256xf32> to vector<8x256xf32>
    %33 = arith.addf %30, %32 : vector<8x256xf32>
    %cst_24 = arith.constant 0.000000e+00 : f32
    %34 = vector.broadcast %cst_24 : f32 to vector<8x256xf32>
    %35 = arith.maximumf %33, %34 : vector<8x256xf32>
    %c0_25 = arith.constant 0 : index
    %c0_26 = arith.constant 0 : index
    %36 = vector.load %arg9[%c0_25, %c0_26] : memref<8x256xf32, #tpu.memory_space<vmem>>, vector<8x256xf32>
    tpu.vector_store %arg9[%c0_25, %c0_26], %35 {strides = array<i32>} : memref<8x256xf32, #tpu.memory_space<vmem>>, vector<8x256xf32>,
    return
  }
}

</mosaic_0001>

<llo_original>
// kernel: _forward_impl.1
$region0: #{_forward_impl.1}
  #allocation0 [shape = 'u32[]', space=smem, size = 0x4, offset = 0x4, fixed_abs, tag = 'smem constant byte address 0x4 - core index']
  #allocation1 [shape = 'u32[144,128]{1,0:T(1,128)}', space=vmem, size = 0x12000, scoped, tag = 'internal scratch']
  #allocation2 [shape = 'f32[128,256]{1,0:T(8,128)}', space=vmem, size = 0x20000, scoped, tag = 'scratch operand']
  #allocation3 [shape = 'f32[256,256]{1,0:T(8,128)}', space=vmem, size = 0x40000, scoped, tag = 'scratch operand']
  #allocation4 [shape = 'f32[256,256]{1,0:T(8,128)}', space=vmem, size = 0x40000, scoped, tag = 'scratch operand']
  #allocation5 [shape = 's32[3]{0}', space=sflag, size = 0xc, scoped, tag = 'scratch operand']
  #allocation13 [shape = 's32[]', space=sflag, size = 0x4, offset = 0, fixed_abs, tag = 'sflag constant byte address 0x0 - dummy sync flag']
  #allocation14 [shape = 's32[]', space=sflag, size = 0x4, offset = 0, fixed_abs, tag = 'sflag constant byte address 0x0 - dummy sync flag']
  #allocation15 [shape = 'u32[]', space=smem, size = 0x4, offset = 0x44, fixed_abs, tag = 'smem constant byte address 0x44 - assertion arg 0']
  #allocation16 [shape = 'u32[]', space=smem, size = 0x4, offset = 0x48, fixed_abs, tag = 'smem constant byte address 0x48 - assertion arg 1']
  #allocation17 [shape = 's32[]', space=sflag, size = 0x4, offset = 0, fixed_abs, tag = 'sflag constant byte address 0x0 - dummy sync flag']
  #allocation18 [shape = 's32[]', space=sflag, size = 0x4, offset = 0, fixed_abs, tag = 'sflag constant byte address 0x0 - dummy sync flag']
  #allocation19 [shape = 's32[]', space=sflag, size = 0x4, offset = 0, fixed_abs, tag = 'sflag constant byte address 0x0 - dummy sync flag']
  #allocation20 [shape = 's32[]', space=sflag, size = 0x4, offset = 0, fixed_abs, tag = 'sflag constant byte address 0x0 - dummy sync flag']
  %s0 = inlined_call_operand.hbm [shape: f32[8,128], index: 0, kind: input, shape index: {}]
  %s1 = inlined_call_operand.hbm [shape: f32[128,256], index: 1, kind: input, shape index: {}]
  %s2 = inlined_call_operand.hbm [shape: f32[256,256], index: 2, kind: input, shape index: {}]
  %s3 = inlined_call_operand.hbm [shape: f32[256,256], index: 3, kind: input, shape index: {}]
  %s4 = inlined_call_operand.vmem [shape: f32[1,256], index: 4, kind: input, shape index: {}]
  %s5 = inlined_call_operand.vmem [shape: f32[1,256], index: 5, kind: input, shape index: {}]
  %s6 = inlined_call_operand.vmem [shape: f32[1,256], index: 6, kind: input, shape index: {}]
  %s7 = inlined_call_operand.hbm [shape: f32[8,256], index: 7, kind: output, shape index: {0}]
  %s8 = inlined_call_operand.hbm [shape: f32[8,256], index: 8, kind: output, shape index: {1}]
  %s9 = inlined_call_operand.hbm [shape: f32[8,256], index: 9, kind: output, shape index: {2}]
  %10 = xla_tuple %s7, %s8, %s9
  %s11 = sld [smem:[#allocation0]]
  $region58: #{_forward_impl.1} parent=0
    _
  %s13 = ssub.s32 1, %s11
  %s14 = scalar_select 0, %s13, %s11
  $region1: #{_forward_impl.1} parent=0
    #allocation6 [shape = 'u8[4096]{0}', space=vmem, size = 0x1000, scoped, tag = 'input window, operand 0, single buffered']
    #allocation7 [shape = 's32[1]{0}', space=sflag, size = 0x4, scoped, tag = 'scoped memory for _forward_impl.1']
    #allocation8 [shape = 's32[1]{0}', space=sflag, size = 0x4, scoped, tag = 'scoped memory for _forward_impl.1']
    #allocation9 [shape = 'u8[8192]{0}', space=vmem, size = 0x2000, scoped, tag = 'output window, operand 0, single buffered']
    #allocation10 [shape = 'u8[8192]{0}', space=vmem, size = 0x2000, scoped, tag = 'output window, operand 1, single buffered']
    #allocation11 [shape = 's32[1]{0}', space=sflag, size = 0x4, scoped, tag = 'scoped memory for _forward_impl.1']
    #allocation12 [shape = 'u8[8192]{0}', space=vmem, size = 0x2000, scoped, tag = 'output window, operand 2, single buffered']
    %15 = vsyncpa [#allocation7], 0
    %16 = vsyncpa [#allocation8], 0
    %17 = vsyncpa [#allocation11], 0
    // Predicated region
    $region2: #{_forward_impl.1} parent=1 // pred_check
      _
    $region3: #{_forward_impl.1} parent=1 // pred_check_branch
      %19 = sbr.rel (0) target = $region5
    $region4: #{_forward_impl.1} parent=1 // pred_region
      %s21 = ssub.s32 128, 128
      %22 = vsyncadd [#allocation7], %s21
      %s24 = sshll.u32 [#allocation6], 4
      %s25 = int_to_ptr.vmem [resolvable:$true] %s24
      %27 = dma.hbm_to_vmem [thread:$0]  %s0, 128, %s25, [#allocation7]
    $region5: #{_forward_impl.1} parent=1 // pred_fallthru
      _
    // Predicated region
    $region6: #{_forward_impl.1} parent=1 // pred_check
      _
    $region7: #{_forward_impl.1} parent=1 // pred_check_branch
      %29 = sbr.rel (0) target = $region9
    $region8: #{_forward_impl.1} parent=1 // pred_region
      _
    $region9: #{_forward_impl.1} parent=1 // pred_fallthru
      _
    // Predicated region
    $region10: #{_forward_impl.1} parent=1 // pred_check
      _
    $region11: #{_forward_impl.1} parent=1 // pred_check_branch
      %31 = sbr.rel (0) target = $region13
    $region12: #{_forward_impl.1} parent=1 // pred_region
      _
    $region13: #{_forward_impl.1} parent=1 // pred_fallthru
      _
    // Predicated region
    $region14: #{_forward_impl.1} parent=1 // pred_check
      _
    $region15: #{_forward_impl.1} parent=1 // pred_check_branch
      %33 = sbr.rel (0) target = $region17
    $region16: #{_forward_impl.1} parent=1 // pred_region
      _
    $region17: #{_forward_impl.1} parent=1 // pred_fallthru
      _
    // Predicated region
    $region18: #{_forward_impl.1} parent=1 // pred_check
      _
    $region19: #{_forward_impl.1} parent=1 // pred_check_branch
      %35 = sbr.rel (0) target = $region21
    $region20: #{_forward_impl.1} parent=1 // pred_region
      %36 = dma.done [#allocation7], 128
    $region21: #{_forward_impl.1} parent=1 // pred_fallthru
      _
    // Predicated region
    $region22: #{_forward_impl.1} parent=1 // pred_check
      _
    $region23: #{_forward_impl.1} parent=1 // pred_check_branch
      %38 = sbr.rel target = $region25
    $region24: #{_forward_impl.1} parent=1 // pred_region
      %39 = sst [smem:[#allocation15]] [#allocation14]
      %40 = sst [smem:[#allocation16]] [#allocation13]
    $region25: #{_forward_impl.1} parent=1 // pred_fallthru
      _
    %42 = shalt.err (0)
    %s44 = sshll.u32 [#allocation2], 4
    %s45 = int_to_ptr.vmem [resolvable:$true] %s44
    %47 = dma.hbm_to_vmem [thread:$0]  %s1, 4096, %s45, [#allocation5]
    %s48 = scalar_lea.sflag [#allocation5], 1
    // Predicated region
    $region26: #{_forward_impl.1} parent=1 // pred_check
      _
    $region27: #{_forward_impl.1} parent=1 // pred_check_branch
      %50 = sbr.rel target = $region29
    $region28: #{_forward_impl.1} parent=1 // pred_region
      %51 = sst [smem:[#allocation15]] [#allocation18]
      %52 = sst [smem:[#allocation16]] [#allocation17]
    $region29: #{_forward_impl.1} parent=1 // pred_fallthru
      _
    %54 = shalt.err (0)
    %s56 = sshll.u32 [#allocation3], 4
    %s57 = int_to_ptr.vmem [resolvable:$true] %s56
    %59 = dma.hbm_to_vmem [thread:$0]  %s2, 8192, %s57, %s48
    %s60 = scalar_lea.sflag [#allocation5], 2
    // Predicated region
    $region30: #{_forward_impl.1} parent=1 // pred_check
      _
    $region31: #{_forward_impl.1} parent=1 // pred_check_branch
      %62 = sbr.rel target = $region33
    $region32: #{_forward_impl.1} parent=1 // pred_region
      %63 = sst [smem:[#allocation15]] [#allocation20]
      %64 = sst [smem:[#allocation16]] [#allocation19]
    $region33: #{_forward_impl.1} parent=1 // pred_fallthru
      _
    %66 = shalt.err (0)
    %s68 = sshll.u32 [#allocation4], 4
    %s69 = int_to_ptr.vmem [resolvable:$true] %s68
    %71 = dma.hbm_to_vmem [thread:$0]  %s3, 8192, %s69, %s60
    %v72 = vld [vmem:[#allocation6] sm:$0xff]
    %s73 = smul.u32 8, 16
    %s74 = smul.u32 %s73, 2
    %s75 = sshll.u32 %s74, 4
    %76 = dma.done [#allocation5], %s75
    %v77 = vld [vmem:[#allocation2] sm:$0xff]
    %v78 = vld [vmem:[#allocation2 + $0x8] sm:$0xff]
    %v79 = vld [vmem:[#allocation2 + $0x10] sm:$0xff]
    %v80 = vld [vmem:[#allocation2 + $0x18] sm:$0xff]
    %v81 = vld [vmem:[#allocation2 + $0x20] sm:$0xff]
    %v82 = vld [vmem:[#allocation2 + $0x28] sm:$0xff]
    %v83 = vld [vmem:[#allocation2 + $0x30] sm:$0xff]
    %v84 = vld [vmem:[#allocation2 + $0x38] sm:$0xff]
    %v85 = vld [vmem:[#allocation2 + $0x40] sm:$0xff]
    %v86 = vld [vmem:[#allocation2 + $0x48] sm:$0xff]
    %v87 = vld [vmem:[#allocation2 + $0x50] sm:$0xff]
    %v88 = vld [vmem:[#allocation2 + $0x58] sm:$0xff]
    %v89 = vld [vmem:[#allocation2 + $0x60] sm:$0xff]
    %v90 = vld [vmem:[#allocation2 + $0x68] sm:$0xff]
    %v91 = vld [vmem:[#allocation2 + $0x70] sm:$0xff]
    %v92 = vld [vmem:[#allocation2 + $0x78] sm:$0xff]
    %v93 = vld [vmem:[#allocation2 + $0x80] sm:$0xff]
    %v94 = vld [vmem:[#allocation2 + $0x88] sm:$0xff]
    %v95 = vld [vmem:[#allocation2 + $0x90] sm:$0xff]
    %v96 = vld [vmem:[#allocation2 + $0x98] sm:$0xff]
    %v97 = vld [vmem:[#allocation2 + $0xa0] sm:$0xff]
    %v98 = vld [vmem:[#allocation2 + $0xa8] sm:$0xff]
    %v99 = vld [vmem:[#allocation2 + $0xb0] sm:$0xff]
    %v100 = vld [vmem:[#allocation2 + $0xb8] sm:$0xff]
    %v101 = vld [vmem:[#allocation2 + $0xc0] sm:$0xff]
    %v102 = vld [vmem:[#allocation2 + $0xc8] sm:$0xff]
    %v103 = vld [vmem:[#allocation2 + $0xd0] sm:$0xff]
    %v104 = vld [vmem:[#allocation2 + $0xd8] sm:$0xff]
    %v105 = vld [vmem:[#allocation2 + $0xe0] sm:$0xff]
    %v106 = vld [vmem:[#allocation2 + $0xe8] sm:$0xff]
    %v107 = vld [vmem:[#allocation2 + $0xf0] sm:$0xff]
    %v108 = vld [vmem:[#allocation2 + $0xf8] sm:$0xff]
    %v109 = vld [vmem:[%s4] sm:$0x3]
    %v111 = vlaneseq
    %v112 = vshrl.u32 %v111, 7
    %v113 = vsub.s32 0, %v112
    %v114 = vrot.slane %v109, %v113
    %v115 = vlaneseq
    %v116 = vshrl.u32 %v115, 7
    %v117 = vsub.s32 1, %v116
    %v118 = vrot.slane %v109, %v117
    %121 = vmatprep.subr.mxu0 %v108
    %122 = vmatpush1.msra.mxu0 %v107
    %123 = vmatprep.subr.mxu0 %v106
    %124 = vmatpush1.msra.mxu0 %v105
    %125 = vmatprep.subr.mxu0 %v104
    %126 = vmatpush1.msra.mxu0 %v103
    %127 = vmatprep.subr.mxu0 %v102
    %128 = vmatpush1.msra.mxu0 %v101
    %129 = vmatprep.subr.mxu0 %v100
    %130 = vmatpush1.msra.mxu0 %v99
    %131 = vmatprep.subr.mxu0 %v98
    %132 = vmatpush1.msra.mxu0 %v97
    %133 = vmatprep.subr.mxu0 %v96
    %134 = vmatpush1.msra.mxu0 %v95
    %135 = vmatprep.subr.mxu0 %v94
    %136 = vmatpush1.msra.mxu0 %v93
    %137 = vmatprep.subr.mxu0 %v92
    %138 = vmatpush1.msra.mxu0 %v91
    %139 = vmatprep.subr.mxu0 %v90
    %140 = vmatpush1.msra.mxu0 %v89
    %141 = vmatprep.subr.mxu0 %v88
    %142 = vmatpush1.msra.mxu0 %v87
    %143 = vmatprep.subr.mxu0 %v86
    %144 = vmatpush1.msra.mxu0 %v85
    %145 = vmatprep.subr.mxu0 %v84
    %146 = vmatpush1.msra.mxu0 %v83
    %147 = vmatprep.subr.mxu0 %v82
    %148 = vmatpush1.msra.mxu0 %v81
    %149 = vmatprep.subr.mxu0 %v80
    %150 = vmatpush1.msra.mxu0 %v79
    %151 = vmatprep.subr.mxu0 %v78
    %152 = vmatpush1.msra.mxu0 %v77
    %153 = vmatprep.subr.mxu0 0.0
    %154 = vmatpush2.msra.mxu0 0.0
    %155 = vmatprep.subr.mxu0 0.0
    %156 = vmatpush2.msra.mxu0 0.0
    %157 = vmatprep.subr.mxu0 0.0
    %158 = vmatpush2.msra.mxu0 0.0
    %159 = vmatprep.subr.mxu0 0.0
    %160 = vmatpush2.msra.mxu0 0.0
    %161 = vmatprep.subr.mxu0 0.0
    %162 = vmatpush2.msra.mxu0 0.0
    %163 = vmatprep.subr.mxu0 0.0
    %164 = vmatpush2.msra.mxu0 0.0
    %165 = vmatprep.subr.mxu0 0.0
    %166 = vmatpush2.msra.mxu0 0.0
    %167 = vmatprep.subr.mxu0 0.0
    %168 = vmatpush2.msra.mxu0 0.0
    %169 = vmatprep.subr.mxu0 0.0
    %170 = vmatpush2.msra.mxu0 0.0
    %171 = vmatprep.subr.mxu0 0.0
    %172 = vmatpush2.msra.mxu0 0.0
    %173 = vmatprep.subr.mxu0 0.0
    %174 = vmatpush2.msra.mxu0 0.0
    %175 = vmatprep.subr.mxu0 0.0
    %176 = vmatpush2.msra.mxu0 0.0
    %177 = vmatprep.subr.mxu0 0.0
    %178 = vmatpush2.msra.mxu0 0.0
    %179 = vmatprep.subr.mxu0 0.0
    %180 = vmatpush2.msra.mxu0 0.0
    %181 = vmatprep.subr.mxu0 0.0
    %182 = vmatpush2.msra.mxu0 0.0
    %183 = vmatprep.subr.mxu0 0.0
    %184 = vmatpush2.msra.mxu0 0.0
    %185 = vmatprep.mubr.f32.mxu0 0.0
    %186 = vmatmul.mubr.f32.gmra.mxu0 %v72
    %v187 = vpop.f32.mrf.mxu0
    %v188 = vadd.f32 %v114, %v187
    %v189 = vpop.f32.mrf.mxu0
    %v190 = vadd.f32 %v118, %v189
    %191 = vdwg.mxu0
    %v192 = vmax.f32 %v188, 0.0
    %v193 = vmax.f32 %v190, 0.0
    %194 = vst [vmem:[#allocation9] sm:$0xff] %v192
    %195 = vst [vmem:[#allocation9 + $0x8] sm:$0xff] %v193
    %s196 = smul.u32 8, 32
    %s197 = smul.u32 %s196, 2
    %s198 = sshll.u32 %s197, 4
    %199 = dma.done %s48, %s198
    %v200 = vld [vmem:[#allocation3] sm:$0xff]
    %v201 = vld [vmem:[#allocation3 + $0x8] sm:$0xff]
    %v202 = vld [vmem:[#allocation3 + $0x10] sm:$0xff]
    %v203 = vld [vmem:[#allocation3 + $0x18] sm:$0xff]
    %v204 = vld [vmem:[#allocation3 + $0x20] sm:$0xff]
    %v205 = vld [vmem:[#allocation3 + $0x28] sm:$0xff]
    %v206 = vld [vmem:[#allocation3 + $0x30] sm:$0xff]
    %v207 = vld [vmem:[#allocation3 + $0x38] sm:$0xff]
    %v208 = vld [vmem:[#allocation3 + $0x40] sm:$0xff]
    %v209 = vld [vmem:[#allocation3 + $0x48] sm:$0xff]
    %v210 = vld [vmem:[#allocation3 + $0x50] sm:$0xff]
    %v211 = vld [vmem:[#allocation3 + $0x58] sm:$0xff]
    %v212 = vld [vmem:[#allocation3 + $0x60] sm:$0xff]
    %v213 = vld [vmem:[#allocation3 + $0x68] sm:$0xff]
    %v214 = vld [vmem:[#allocation3 + $0x70] sm:$0xff]
    %v215 = vld [vmem:[#allocation3 + $0x78] sm:$0xff]
    %v216 = vld [vmem:[#allocation3 + $0x80] sm:$0xff]
    %v217 = vld [vmem:[#allocation3 + $0x88] sm:$0xff]
    %v218 = vld [vmem:[#allocation3 + $0x90] sm:$0xff]
    %v219 = vld [vmem:[#allocation3 + $0x98] sm:$0xff]
    %v220 = vld [vmem:[#allocation3 + $0xa0] sm:$0xff]
    %v221 = vld [vmem:[#allocation3 + $0xa8] sm:$0xff]
    %v222 = vld [vmem:[#allocation3 + $0xb0] sm:$0xff]
    %v223 = vld [vmem:[#allocation3 + $0xb8] sm:$0xff]
    %v224 = vld [vmem:[#allocation3 + $0xc0] sm:$0xff]
    %v225 = vld [vmem:[#allocation3 + $0xc8] sm:$0xff]
    %v226 = vld [vmem:[#allocation3 + $0xd0] sm:$0xff]
    %v227 = vld [vmem:[#allocation3 + $0xd8] sm:$0xff]
    %v228 = vld [vmem:[#allocation3 + $0xe0] sm:$0xff]
    %v229 = vld [vmem:[#allocation3 + $0xe8] sm:$0xff]
    %v230 = vld [vmem:[#allocation3 + $0xf0] sm:$0xff]
    %v231 = vld [vmem:[#allocation3 + $0xf8] sm:$0xff]
    %v232 = vld [vmem:[#allocation3 + $0x100] sm:$0xff]
    %v233 = vld [vmem:[#allocation3 + $0x108] sm:$0xff]
    %v234 = vld [vmem:[#allocation3 + $0x110] sm:$0xff]
    %v235 = vld [vmem:[#allocation3 + $0x118] sm:$0xff]
    %v236 = vld [vmem:[#allocation3 + $0x120] sm:$0xff]
    %v237 = vld [vmem:[#allocation3 + $0x128] sm:$0xff]
    %v238 = vld [vmem:[#allocation3 + $0x130] sm:$0xff]
    %v239 = vld [vmem:[#allocation3 + $0x138] sm:$0xff]
    %v240 = vld [vmem:[#allocation3 + $0x140] sm:$0xff]
    %v241 = vld [vmem:[#allocation3 + $0x148] sm:$0xff]
    %v242 = vld [vmem:[#allocation3 + $0x150] sm:$0xff]
    %v243 = vld [vmem:[#allocation3 + $0x158] sm:$0xff]
    %v244 = vld [vmem:[#allocation3 + $0x160] sm:$0xff]
    %v245 = vld [vmem:[#allocation3 + $0x168] sm:$0xff]
    %v246 = vld [vmem:[#allocation3 + $0x170] sm:$0xff]
    %v247 = vld [vmem:[#allocation3 + $0x178] sm:$0xff]
    %v248 = vld [vmem:[#allocation3 + $0x180] sm:$0xff]
    %v249 = vld [vmem:[#allocation3 + $0x188] sm:$0xff]
    %v250 = vld [vmem:[#allocation3 + $0x190] sm:$0xff]
    %v251 = vld [vmem:[#allocation3 + $0x198] sm:$0xff]
    %v252 = vld [vmem:[#allocation3 + $0x1a0] sm:$0xff]
    %v253 = vld [vmem:[#allocation3 + $0x1a8] sm:$0xff]
    %v254 = vld [vmem:[#allocation3 + $0x1b0] sm:$0xff]
    %v255 = vld [vmem:[#allocation3 + $0x1b8] sm:$0xff]
    %v256 = vld [vmem:[#allocation3 + $0x1c0] sm:$0xff]
    %v257 = vld [vmem:[#allocation3 + $0x1c8] sm:$0xff]
    %v258 = vld [vmem:[#allocation3 + $0x1d0] sm:$0xff]
    %v259 = vld [vmem:[#allocation3 + $0x1d8] sm:$0xff]
    %v260 = vld [vmem:[#allocation3 + $0x1e0] sm:$0xff]
    %v261 = vld [vmem:[#allocation3 + $0x1e8] sm:$0xff]
    %v262 = vld [vmem:[#allocation3 + $0x1f0] sm:$0xff]
    %v263 = vld [vmem:[#allocation3 + $0x1f8] sm:$0xff]
    %v264 = vld [vmem:[%s5] sm:$0x3]
    %v266 = vlaneseq
    %v267 = vshrl.u32 %v266, 7
    %v268 = vsub.s32 0, %v267
    %v269 = vrot.slane %v264, %v268
    %v270 = vlaneseq
    %v271 = vshrl.u32 %v270, 7
    %v272 = vsub.s32 1, %v271
    %v273 = vrot.slane %v264, %v272
    %276 = vmatprep.subr.mxu0 %v231
    %277 = vmatpush1.msra.mxu0 %v230
    %278 = vmatprep.subr.mxu0 %v229
    %279 = vmatpush1.msra.mxu0 %v228
    %280 = vmatprep.subr.mxu0 %v227
    %281 = vmatpush1.msra.mxu0 %v226
    %282 = vmatprep.subr.mxu0 %v225
    %283 = vmatpush1.msra.mxu0 %v224
    %284 = vmatprep.subr.mxu0 %v223
    %285 = vmatpush1.msra.mxu0 %v222
    %286 = vmatprep.subr.mxu0 %v221
    %287 = vmatpush1.msra.mxu0 %v220
    %288 = vmatprep.subr.mxu0 %v219
    %289 = vmatpush1.msra.mxu0 %v218
    %290 = vmatprep.subr.mxu0 %v217
    %291 = vmatpush1.msra.mxu0 %v216
    %292 = vmatprep.subr.mxu0 %v215
    %293 = vmatpush1.msra.mxu0 %v214
    %294 = vmatprep.subr.mxu0 %v213
    %295 = vmatpush1.msra.mxu0 %v212
    %296 = vmatprep.subr.mxu0 %v211
    %297 = vmatpush1.msra.mxu0 %v210
    %298 = vmatprep.subr.mxu0 %v209
    %299 = vmatpush1.msra.mxu0 %v208
    %300 = vmatprep.subr.mxu0 %v207
    %301 = vmatpush1.msra.mxu0 %v206
    %302 = vmatprep.subr.mxu0 %v205
    %303 = vmatpush1.msra.mxu0 %v204
    %304 = vmatprep.subr.mxu0 %v203
    %305 = vmatpush1.msra.mxu0 %v202
    %306 = vmatprep.subr.mxu0 %v201
    %307 = vmatpush1.msra.mxu0 %v200
    %308 = vmatprep.subr.mxu0 %v263
    %309 = vmatpush2.msra.mxu0 %v262
    %310 = vmatprep.subr.mxu0 %v261
    %311 = vmatpush2.msra.mxu0 %v260
    %312 = vmatprep.subr.mxu0 %v259
    %313 = vmatpush2.msra.mxu0 %v258
    %314 = vmatprep.subr.mxu0 %v257
    %315 = vmatpush2.msra.mxu0 %v256
    %316 = vmatprep.subr.mxu0 %v255
    %317 = vmatpush2.msra.mxu0 %v254
    %318 = vmatprep.subr.mxu0 %v253
    %319 = vmatpush2.msra.mxu0 %v252
    %320 = vmatprep.subr.mxu0 %v251
    %321 = vmatpush2.msra.mxu0 %v250
    %322 = vmatprep.subr.mxu0 %v249
    %323 = vmatpush2.msra.mxu0 %v248
    %324 = vmatprep.subr.mxu0 %v247
    %325 = vmatpush2.msra.mxu0 %v246
    %326 = vmatprep.subr.mxu0 %v245
    %327 = vmatpush2.msra.mxu0 %v244
    %328 = vmatprep.subr.mxu0 %v243
    %329 = vmatpush2.msra.mxu0 %v242
    %330 = vmatprep.subr.mxu0 %v241
    %331 = vmatpush2.msra.mxu0 %v240
    %332 = vmatprep.subr.mxu0 %v239
    %333 = vmatpush2.msra.mxu0 %v238
    %334 = vmatprep.subr.mxu0 %v237
    %335 = vmatpush2.msra.mxu0 %v236
    %336 = vmatprep.subr.mxu0 %v235
    %337 = vmatpush2.msra.mxu0 %v234
    %338 = vmatprep.subr.mxu0 %v233
    %339 = vmatpush2.msra.mxu0 %v232
    %340 = vmatprep.mubr.f32.mxu0 %v193
    %341 = vmatmul.mubr.f32.gmra.mxu0 %v192
    %v342 = vpop.f32.mrf.mxu0
    %v343 = vadd.f32 %v269, %v342
    %v344 = vpop.f32.mrf.mxu0
    %v345 = vadd.f32 %v273, %v344
    %346 = vdwg.mxu0
    %v347 = vmax.f32 %v343, 0.0
    %v348 = vmax.f32 %v345, 0.0
    %349 = vst [vmem:[#allocation10] sm:$0xff] %v347
    %350 = vst [vmem:[#allocation10 + $0x8] sm:$0xff] %v348
    %s351 = sshll.u32 %s197, 4
    %352 = dma.done %s60, %s351
    %v353 = vld [vmem:[#allocation4] sm:$0xff]
    %v354 = vld [vmem:[#allocation4 + $0x8] sm:$0xff]
    %v355 = vld [vmem:[#allocation4 + $0x10] sm:$0xff]
    %v356 = vld [vmem:[#allocation4 + $0x18] sm:$0xff]
    %v357 = vld [vmem:[#allocation4 + $0x20] sm:$0xff]
    %v358 = vld [vmem:[#allocation4 + $0x28] sm:$0xff]
    %v359 = vld [vmem:[#allocation4 + $0x30] sm:$0xff]
    %v360 = vld [vmem:[#allocation4 + $0x38] sm:$0xff]
    %v361 = vld [vmem:[#allocation4 + $0x40] sm:$0xff]
    %v362 = vld [vmem:[#allocation4 + $0x48] sm:$0xff]
    %v363 = vld [vmem:[#allocation4 + $0x50] sm:$0xff]
    %v364 = vld [vmem:[#allocation4 + $0x58] sm:$0xff]
    %v365 = vld [vmem:[#allocation4 + $0x60] sm:$0xff]
    %v366 = vld [vmem:[#allocation4 + $0x68] sm:$0xff]
    %v367 = vld [vmem:[#allocation4 + $0x70] sm:$0xff]
    %v368 = vld [vmem:[#allocation4 + $0x78] sm:$0xff]
    %v369 = vld [vmem:[#allocation4 + $0x80] sm:$0xff]
    %v370 = vld [vmem:[#allocation4 + $0x88] sm:$0xff]
    %v371 = vld [vmem:[#allocation4 + $0x90] sm:$0xff]
    %v372 = vld [vmem:[#allocation4 + $0x98] sm:$0xff]
    %v373 = vld [vmem:[#allocation4 + $0xa0] sm:$0xff]
    %v374 = vld [vmem:[#allocation4 + $0xa8] sm:$0xff]
    %v375 = vld [vmem:[#allocation4 + $0xb0] sm:$0xff]
    %v376 = vld [vmem:[#allocation4 + $0xb8] sm:$0xff]
    %v377 = vld [vmem:[#allocation4 + $0xc0] sm:$0xff]
    %v378 = vld [vmem:[#allocation4 + $0xc8] sm:$0xff]
    %v379 = vld [vmem:[#allocation4 + $0xd0] sm:$0xff]
    %v380 = vld [vmem:[#allocation4 + $0xd8] sm:$0xff]
    %v381 = vld [vmem:[#allocation4 + $0xe0] sm:$0xff]
    %v382 = vld [vmem:[#allocation4 + $0xe8] sm:$0xff]
    %v383 = vld [vmem:[#allocation4 + $0xf0] sm:$0xff]
    %v384 = vld [vmem:[#allocation4 + $0xf8] sm:$0xff]
    %v385 = vld [vmem:[#allocation4 + $0x100] sm:$0xff]
    %v386 = vld [vmem:[#allocation4 + $0x108] sm:$0xff]
    %v387 = vld [vmem:[#allocation4 + $0x110] sm:$0xff]
    %v388 = vld [vmem:[#allocation4 + $0x118] sm:$0xff]
    %v389 = vld [vmem:[#allocation4 + $0x120] sm:$0xff]
    %v390 = vld [vmem:[#allocation4 + $0x128] sm:$0xff]
    %v391 = vld [vmem:[#allocation4 + $0x130] sm:$0xff]
    %v392 = vld [vmem:[#allocation4 + $0x138] sm:$0xff]
    %v393 = vld [vmem:[#allocation4 + $0x140] sm:$0xff]
    %v394 = vld [vmem:[#allocation4 + $0x148] sm:$0xff]
    %v395 = vld [vmem:[#allocation4 + $0x150] sm:$0xff]
    %v396 = vld [vmem:[#allocation4 + $0x158] sm:$0xff]
    %v397 = vld [vmem:[#allocation4 + $0x160] sm:$0xff]
    %v398 = vld [vmem:[#allocation4 + $0x168] sm:$0xff]
    %v399 = vld [vmem:[#allocation4 + $0x170] sm:$0xff]
    %v400 = vld [vmem:[#allocation4 + $0x178] sm:$0xff]
    %v401 = vld [vmem:[#allocation4 + $0x180] sm:$0xff]
    %v402 = vld [vmem:[#allocation4 + $0x188] sm:$0xff]
    %v403 = vld [vmem:[#allocation4 + $0x190] sm:$0xff]
    %v404 = vld [vmem:[#allocation4 + $0x198] sm:$0xff]
    %v405 = vld [vmem:[#allocation4 + $0x1a0] sm:$0xff]
    %v406 = vld [vmem:[#allocation4 + $0x1a8] sm:$0xff]
    %v407 = vld [vmem:[#allocation4 + $0x1b0] sm:$0xff]
    %v408 = vld [vmem:[#allocation4 + $0x1b8] sm:$0xff]
    %v409 = vld [vmem:[#allocation4 + $0x1c0] sm:$0xff]
    %v410 = vld [vmem:[#allocation4 + $0x1c8] sm:$0xff]
    %v411 = vld [vmem:[#allocation4 + $0x1d0] sm:$0xff]
    %v412 = vld [vmem:[#allocation4 + $0x1d8] sm:$0xff]
    %v413 = vld [vmem:[#allocation4 + $0x1e0] sm:$0xff]
    %v414 = vld [vmem:[#allocation4 + $0x1e8] sm:$0xff]
    %v415 = vld [vmem:[#allocation4 + $0x1f0] sm:$0xff]
    %v416 = vld [vmem:[#allocation4 + $0x1f8] sm:$0xff]
    %v417 = vld [vmem:[%s6] sm:$0x3]
    %v419 = vlaneseq
    %v420 = vshrl.u32 %v419, 7
    %v421 = vsub.s32 0, %v420
    %v422 = vrot.slane %v417, %v421
    %v423 = vlaneseq
    %v424 = vshrl.u32 %v423, 7
    %v425 = vsub.s32 1, %v424
    %v426 = vrot.slane %v417, %v425
    %429 = vmatprep.subr.mxu0 %v384
    %430 = vmatpush1.msra.mxu0 %v383
    %431 = vmatprep.subr.mxu0 %v382
    %432 = vmatpush1.msra.mxu0 %v381
    %433 = vmatprep.subr.mxu0 %v380
    %434 = vmatpush1.msra.mxu0 %v379
    %435 = vmatprep.subr.mxu0 %v378
    %436 = vmatpush1.msra.mxu0 %v377
    %437 = vmatprep.subr.mxu0 %v376
    %438 = vmatpush1.msra.mxu0 %v375
    %439 = vmatprep.subr.mxu0 %v374
    %440 = vmatpush1.msra.mxu0 %v373
    %441 = vmatprep.subr.mxu0 %v372
    %442 = vmatpush1.msra.mxu0 %v371
    %443 = vmatprep.subr.mxu0 %v370
    %444 = vmatpush1.msra.mxu0 %v369
    %445 = vmatprep.subr.mxu0 %v368
    %446 = vmatpush1.msra.mxu0 %v367
    %447 = vmatprep.subr.mxu0 %v366
    %448 = vmatpush1.msra.mxu0 %v365
    %449 = vmatprep.subr.mxu0 %v364
    %450 = vmatpush1.msra.mxu0 %v363
    %451 = vmatprep.subr.mxu0 %v362
    %452 = vmatpush1.msra.mxu0 %v361
    %453 = vmatprep.subr.mxu0 %v360
    %454 = vmatpush1.msra.mxu0 %v359
    %455 = vmatprep.subr.mxu0 %v358
    %456 = vmatpush1.msra.mxu0 %v357
    %457 = vmatprep.subr.mxu0 %v356
    %458 = vmatpush1.msra.mxu0 %v355
    %459 = vmatprep.subr.mxu0 %v354
    %460 = vmatpush1.msra.mxu0 %v353
    %461 = vmatprep.subr.mxu0 %v416
    %462 = vmatpush2.msra.mxu0 %v415
    %463 = vmatprep.subr.mxu0 %v414
    %464 = vmatpush2.msra.mxu0 %v413
    %465 = vmatprep.subr.mxu0 %v412
    %466 = vmatpush2.msra.mxu0 %v411
    %467 = vmatprep.subr.mxu0 %v410
    %468 = vmatpush2.msra.mxu0 %v409
    %469 = vmatprep.subr.mxu0 %v408
    %470 = vmatpush2.msra.mxu0 %v407
    %471 = vmatprep.subr.mxu0 %v406
    %472 = vmatpush2.msra.mxu0 %v405
    %473 = vmatprep.subr.mxu0 %v404
    %474 = vmatpush2.msra.mxu0 %v403
    %475 = vmatprep.subr.mxu0 %v402
    %476 = vmatpush2.msra.mxu0 %v401
    %477 = vmatprep.subr.mxu0 %v400
    %478 = vmatpush2.msra.mxu0 %v399
    %479 = vmatprep.subr.mxu0 %v398
    %480 = vmatpush2.msra.mxu0 %v397
    %481 = vmatprep.subr.mxu0 %v396
    %482 = vmatpush2.msra.mxu0 %v395
    %483 = vmatprep.subr.mxu0 %v394
    %484 = vmatpush2.msra.mxu0 %v393
    %485 = vmatprep.subr.mxu0 %v392
    %486 = vmatpush2.msra.mxu0 %v391
    %487 = vmatprep.subr.mxu0 %v390
    %488 = vmatpush2.msra.mxu0 %v389
    %489 = vmatprep.subr.mxu0 %v388
    %490 = vmatpush2.msra.mxu0 %v387
    %491 = vmatprep.subr.mxu0 %v386
    %492 = vmatpush2.msra.mxu0 %v385
    %493 = vmatprep.mubr.f32.mxu0 %v348
    %494 = vmatmul.mubr.f32.gmra.mxu0 %v347
    %v495 = vpop.f32.mrf.mxu0
    %v496 = vadd.f32 %v422, %v495
    %v497 = vpop.f32.mrf.mxu0
    %v498 = vadd.f32 %v426, %v497
    %499 = vdwg.mxu0
    %v500 = vmax.f32 %v496, 0.0
    %v501 = vmax.f32 %v498, 0.0
    %502 = vst [vmem:[#allocation12] sm:$0xff] %v500
    %503 = vst [vmem:[#allocation12 + $0x8] sm:$0xff] %v501
    // Predicated region
    $region34: #{_forward_impl.1} parent=1 // pred_check
      _
    $region35: #{_forward_impl.1} parent=1 // pred_check_branch
      %505 = sbr.rel (0) target = $region37
    $region36: #{_forward_impl.1} parent=1 // pred_region
      %s507 = ssub.s32 256, 256
      %508 = vsyncadd [#allocation8], %s507
      %s510 = sshll.u32 [#allocation9], 4
      %s511 = int_to_ptr.vmem [resolvable:$true] %s510
      %513 = dma.vmem_to_hbm [thread:$0]  %s511, 256, %s7, [#allocation8]
    $region37: #{_forward_impl.1} parent=1 // pred_fallthru
      _
    // Predicated region
    $region38: #{_forward_impl.1} parent=1 // pred_check
      _
    $region39: #{_forward_impl.1} parent=1 // pred_check_branch
      %515 = sbr.rel (0) target = $region41
    $region40: #{_forward_impl.1} parent=1 // pred_region
      %s517 = ssub.s32 256, 256
      %518 = vsyncadd [#allocation11], %s517
      %s520 = sshll.u32 [#allocation10], 4
      %s521 = int_to_ptr.vmem [resolvable:$true] %s520
      %523 = dma.vmem_to_hbm [thread:$0]  %s521, 256, %s8, [#allocation11]
    $region41: #{_forward_impl.1} parent=1 // pred_fallthru
      _
    // Predicated region
    $region42: #{_forward_impl.1} parent=1 // pred_check
      _
    $region43: #{_forward_impl.1} parent=1 // pred_check_branch
      %525 = sbr.rel (0) target = $region45
    $region44: #{_forward_impl.1} parent=1 // pred_region
      %s527 = ssub.s32 256, 256
      %528 = vsyncadd [#allocation11], %s527
      %s530 = sshll.u32 [#allocation12], 4
      %s531 = int_to_ptr.vmem [resolvable:$true] %s530
      %533 = dma.vmem_to_hbm [thread:$0]  %s531, 256, %s9, [#allocation11]
    $region45: #{_forward_impl.1} parent=1 // pred_fallthru
      _
    // Predicated region
    $region46: #{_forward_impl.1} parent=1 // pred_check
      _
    $region47: #{_forward_impl.1} parent=1 // pred_check_branch
      %535 = sbr.rel (0) target = $region49
    $region48: #{_forward_impl.1} parent=1 // pred_region
      %536 = dma.done [#allocation8], 256
    $region49: #{_forward_impl.1} parent=1 // pred_fallthru
      _
    // Predicated region
    $region50: #{_forward_impl.1} parent=1 // pred_check
      _
    $region51: #{_forward_impl.1} parent=1 // pred_check_branch
      %538 = sbr.rel (0) target = $region53
    $region52: #{_forward_impl.1} parent=1 // pred_region
      %539 = dma.done [#allocation11], 256
    $region53: #{_forward_impl.1} parent=1 // pred_fallthru
      _
    // Predicated region
    $region54: #{_forward_impl.1} parent=1 // pred_check
      _
    $region55: #{_forward_impl.1} parent=1 // pred_check_branch
      %541 = sbr.rel (0) target = $region57
    $region56: #{_forward_impl.1} parent=1 // pred_region
      %542 = dma.done [#allocation11], 256
    $region57: #{_forward_impl.1} parent=1 // pred_fallthru
      _
    %543 = vsyncpa [#allocation7], 1
    %544 = vsyncpa [#allocation8], 1
    %545 = vsyncpa [#allocation11], 1
  %546 = vsyncmov [#allocation5]
  %s547 = vpop.sfrf %546
  %p548 = scmp.eq.s32.totalorder %s547, 0
  %p549 = pneg %p548
  %551 = shalt.err (%p549)
  %s552 = scalar_lea.sflag [#allocation5], 1
  %553 = vsyncmov %s552
  %s554 = vpop.sfrf %553
  %p555 = scmp.eq.s32.totalorder %s554, 0
  %p556 = pneg %p555
  %558 = shalt.err (%p556)
  %s559 = scalar_lea.sflag [#allocation5], 2
  %560 = vsyncmov %s559
  %s561 = vpop.sfrf %560
  %p562 = scmp.eq.s32.totalorder %s561, 0
  %p563 = pneg %p562
  %565 = shalt.err (%p563)

</llo_original>
